<compile_context>
chip_gen: v7x
topology: tpu7x:2x2x1
jax: 0.10.0
libtpu: 0.0.40
codegen_flags: <defaults>
</compile_context>

<pallas_src>
import functools

import jax
import jax.numpy as jnp
import numpy as np
from jax import lax
from jax.experimental import pallas as pl
from jax.experimental.pallas import tpu as pltpu

_BN_EPS = 1e-5


# ----------------------------- Pallas kernels ------------------------------

def _conv_bn_kernel(taps_ref, w_ref, scale_ref, bias_ref, o_ref, *, relu):
    """One MXU matmul + folded BN (+ optional ReLU) per (TM, Cout_p) tile.

    taps_ref : (TM, K)        bf16 im2col tile, K = KH*KW*Cin
    w_ref    : (K, Cout_p)    bf16 weights (resident across the grid)
    scale_ref: (1, Cout_p)    f32  gamma / sqrt(var + eps)
    bias_ref : (1, Cout_p)    f32  beta - mean * scale
    o_ref    : (TM, Cout_p)   f32
    """
    acc = jnp.dot(taps_ref[...], w_ref[...], preferred_element_type=jnp.float32)
    y = acc * scale_ref[...] + bias_ref[...]
    if relu:
        y = jnp.maximum(y, 0.0)
    o_ref[...] = y.astype(o_ref.dtype)


def _conv_bn_add_relu_kernel(taps_ref, w_ref, scale_ref, bias_ref, sc_ref, o_ref):
    """conv2 + bn2 + residual-add + final ReLU fused into one epilogue."""
    acc = jnp.dot(taps_ref[...], w_ref[...], preferred_element_type=jnp.float32)
    y = acc * scale_ref[...] + bias_ref[...] + sc_ref[...].astype(jnp.float32)
    o_ref[...] = jnp.maximum(y, 0.0).astype(o_ref.dtype)


# ------------------------------ glue / wrappers ----------------------------

def _round_up(x, m):
    return (x + m - 1) // m * m


def _im2col(x_nhwc, kh, kw, stride, padding, compute_dtype):
    """Build the (M, KH*KW*Cin) im2col matrix (pure XLA data movement)."""
    n, h, w, c = x_nhwc.shape
    xp = jnp.pad(x_nhwc.astype(compute_dtype),
                 ((0, 0), (padding, padding), (padding, padding), (0, 0)))
    ho = (h + 2 * padding - kh) // stride + 1
    wo = (w + 2 * padding - kw) // stride + 1
    slabs = []
    for i in range(kh):
        for j in range(kw):
            s = xp[:, i:i + stride * (ho - 1) + 1:stride,
                      j:j + stride * (wo - 1) + 1:stride, :]
            slabs.append(s.reshape(n * ho * wo, c))
    cols = jnp.concatenate(slabs, axis=1)  # (M, KH*KW*Cin), tap-major / Cin-minor
    return cols, (n, ho, wo)


def conv_bn(x_nhwc, w_hwio, gamma, beta, mean, var, *, stride, padding, relu,
            shortcut=None, compute_dtype=jnp.bfloat16, out_dtype=jnp.float32,
            tm_max=512):
    """conv2d (bias=False) + inference BN (+ReLU) [+ fused residual add+ReLU]."""
    kh, kw, cin, cout = w_hwio.shape
    cols, (n, ho, wo) = _im2col(x_nhwc, kh, kw, stride, padding, compute_dtype)
    m, k = cols.shape

    # Lane-dense output channels; sublane-friendly / tile-aligned M.
    cout_p = _round_up(cout, 128)
    tm = min(tm_max, _round_up(m, 8))        # 512-wide tiles fit v7x's VMEM too
    m_p = _round_up(m, tm)

    cols_p = jnp.pad(cols, ((0, m_p - m), (0, 0)))
    w_p = jnp.pad(w_hwio.reshape(k, cout).astype(compute_dtype),
                  ((0, 0), (0, cout_p - cout)))

    inv = (gamma / jnp.sqrt(var + _BN_EPS)).astype(jnp.float32)
    scale = jnp.pad(inv, (0, cout_p - cout)).reshape(1, cout_p)
    bias = jnp.pad(beta - mean * inv, (0, cout_p - cout)).reshape(1, cout_p)
    bias = bias.astype(jnp.float32)

    in_specs = [
        pl.BlockSpec((tm, k), lambda i: (i, 0)),          # im2col tile (pipelined)
        pl.BlockSpec((k, cout_p), lambda i: (0, 0)),      # weights, resident
        pl.BlockSpec((1, cout_p), lambda i: (0, 0)),      # BN scale, resident
        pl.BlockSpec((1, cout_p), lambda i: (0, 0)),      # BN bias, resident
    ]
    inputs = [cols_p, w_p, scale, bias]

    if shortcut is not None:
        sc = shortcut.reshape(m, cout).astype(jnp.float32)
        sc_p = jnp.pad(sc, ((0, m_p - m), (0, cout_p - cout)))
        in_specs.append(pl.BlockSpec((tm, cout_p), lambda i: (i, 0)))
        inputs.append(sc_p)
        kernel = _conv_bn_add_relu_kernel
    else:
        kernel = functools.partial(_conv_bn_kernel, relu=relu)

    out = pl.pallas_call(
        kernel,
        out_shape=jax.ShapeDtypeStruct((m_p, cout_p), out_dtype),
        grid=(m_p // tm,),
        in_specs=in_specs,
        out_specs=pl.BlockSpec((tm, cout_p), lambda i: (i, 0)),
        compiler_params=pltpu.CompilerParams(
            dimension_semantics=("parallel",)),
    )(*inputs)

    return out[:m, :cout].reshape(n, ho, wo, cout)


@functools.partial(jax.jit, static_argnames=("stride", "has_shortcut_conv"))
def basic_block_forward(x_nchw, p, *, stride, has_shortcut_conv):
    """Forward of BasicBlock. Input/output are NCHW (PyTorch convention)."""
    x = jnp.transpose(x_nchw, (0, 2, 3, 1))  # -> NHWC

    out1 = conv_bn(x, p["w1"], p["g1"], p["b1"], p["m1"], p["v1"],
                   stride=stride, padding=1, relu=True)

    if has_shortcut_conv:
        sc = conv_bn(x, p["wsc"], p["gsc"], p["bsc"], p["msc"], p["vsc"],
                     stride=stride, padding=0, relu=False)
    else:
        sc = x  # identity shortcut

    # conv2 + bn2 + residual add + final ReLU fused in one kernel epilogue.
    y = conv_bn(out1, p["w2"], p["g2"], p["b2"], p["m2"], p["v2"],
                stride=1, padding=1, relu=True, shortcut=sc)
    return jnp.transpose(y, (0, 3, 1, 2))  # -> NCHW


# ------------------------------ pure-JAX reference -------------------------

def _ref_conv_bn(x, w, g, b, m, v, stride, padding, relu):
    y = lax.conv_general_dilated(
        x.astype(jnp.bfloat16), w.astype(jnp.bfloat16),
        (stride, stride), [(padding, padding)] * 2,
        dimension_numbers=("NHWC", "HWIO", "NHWC"),
        preferred_element_type=jnp.float32)
    inv = g / jnp.sqrt(v + _BN_EPS)
    y = y * inv + (b - m * inv)
    return jnp.maximum(y, 0.0) if relu else y


def _ref_forward(x_nchw, p, *, stride, has_shortcut_conv):
    x = jnp.transpose(x_nchw, (0, 2, 3, 1))
    out = _ref_conv_bn(x, p["w1"], p["g1"], p["b1"], p["m1"], p["v1"], stride, 1, True)
    out = _ref_conv_bn(out, p["w2"], p["g2"], p["b2"], p["m2"], p["v2"], 1, 1, False)
    if has_shortcut_conv:
        sc = _ref_conv_bn(x, p["wsc"], p["gsc"], p["bsc"], p["msc"], p["vsc"],
                          stride, 0, False)
    else:
        sc = x
    y = jnp.maximum(out + sc.astype(jnp.float32), 0.0)
    return jnp.transpose(y, (0, 3, 1, 2))


# ----------------------------------- main -----------------------------------

def _make_params(key, in_planes, planes):
    ks = jax.random.split(key, 6)

    def bn_params(k):
        k1, k2, k3, k4 = jax.random.split(k, 4)
        return (1.0 + 0.1 * jax.random.normal(k1, (planes,), jnp.float32),
                0.1 * jax.random.normal(k2, (planes,), jnp.float32),
                0.1 * jax.random.normal(k3, (planes,), jnp.float32),
                jax.random.uniform(k4, (planes,), jnp.float32, 0.5, 1.5))

    g1, b1, m1, v1 = bn_params(ks[3])
    g2, b2, m2, v2 = bn_params(ks[4])
    gsc, bsc, msc, vsc = bn_params(ks[5])
    return dict(
        w1=0.1 * jax.random.normal(ks[0], (3, 3, in_planes, planes), jnp.float32),
        w2=0.1 * jax.random.normal(ks[1], (3, 3, planes, planes), jnp.float32),
        wsc=0.1 * jax.random.normal(ks[2], (1, 1, in_planes, planes), jnp.float32),
        g1=g1, b1=b1, m1=m1, v1=v1,
        g2=g2, b2=b2, m2=m2, v2=v2,
        gsc=gsc, bsc=bsc, msc=msc, vsc=vsc,
    )


if __name__ == "__main__":
    key = jax.random.PRNGKey(0)
    kx1, kp1, kx2, kp2 = jax.random.split(key, 4)

    # Config A: strided block with conv shortcut.  Config B: identity shortcut.
    configs = [
        dict(in_planes=4, planes=8, stride=2, N=2, H=16, W=16, kx=kx1, kp=kp1),
        dict(in_planes=8, planes=8, stride=1, N=2, H=16, W=16, kx=kx2, kp=kp2),
    ]

    for cfg in configs:
        x = jax.random.normal(cfg["kx"],
                              (cfg["N"], cfg["in_planes"], cfg["H"], cfg["W"]),
                              jnp.float32)
        params = _make_params(cfg["kp"], cfg["in_planes"], cfg["planes"])
        has_sc = (cfg["stride"] != 1) or (cfg["in_planes"] != cfg["planes"])

        y = basic_block_forward(x, params, stride=cfg["stride"],
                                has_shortcut_conv=has_sc)
        y = jax.block_until_ready(y)

        y_ref = _ref_forward(x, params, stride=cfg["stride"],
                             has_shortcut_conv=has_sc)
        np.testing.assert_allclose(np.asarray(y), np.asarray(y_ref),
                                   rtol=1e-3, atol=1e-3)

    print("KERNEL_OK")
</pallas_src>

<mosaic_0001>
module attributes {stable_mosaic.version = 11 : i64} {
  func.func @_conv_bn_kernel(%arg0: i32, %arg1: memref<128x36xbf16, #tpu.memory_space<vmem>>, %arg2: memref<36x128xbf16, #tpu.memory_space<vmem>>, %arg3: memref<1x128xf32, #tpu.memory_space<vmem>>, %arg4: memref<1x128xf32, #tpu.memory_space<vmem>>, %arg5: memref<128x128xf32, #tpu.memory_space<vmem>>) attributes {dimension_semantics = [#tpu.dimension_semantics<parallel>], iteration_bounds = array<i64: 1>, scalar_prefetch = 0 : i64, scratch_operands = 0 : i64, tpu.core_type = #tpu.core_type<tc>, window_params = [{transform_indices = @transform_0, window_bounds = array<i64: 128, 36>}, {pipeline_mode = #tpu.pipeline_mode<synchronous>, transform_indices = @transform_1, window_bounds = array<i64: 36, 128>}, {pipeline_mode = #tpu.pipeline_mode<synchronous>, transform_indices = @transform_2, window_bounds = array<i64: 1, 128>}, {pipeline_mode = #tpu.pipeline_mode<synchronous>, transform_indices = @transform_3, window_bounds = array<i64: 1, 128>}, {transform_indices = @transform_4, window_bounds = array<i64: 128, 128>}]} {
    %c0 = arith.constant 0 : index
    %c0_0 = arith.constant 0 : index
    %0 = vector.load %arg1[%c0, %c0_0] : memref<128x36xbf16, #tpu.memory_space<vmem>>, vector<128x36xbf16>
    %c0_1 = arith.constant 0 : index
    %c0_2 = arith.constant 0 : index
    %1 = vector.load %arg2[%c0_1, %c0_2] : memref<36x128xbf16, #tpu.memory_space<vmem>>, vector<36x128xbf16>
    %cst = arith.constant dense<0.000000e+00> : vector<128x128xf32>
    %2 = tpu.matmul %0, %1, %cst {dimension_numbers = #tpu.dot_dimension_numbers<[1], [0], [0], [1], [0, 0, 1, 1], [], []>} : vector<128x36xbf16>, vector<36x128xbf16>, vector<128x128xf32> -> vector<128x128xf32>
    %c0_3 = arith.constant 0 : index
    %c0_4 = arith.constant 0 : index
    %3 = vector.load %arg3[%c0_3, %c0_4] : memref<1x128xf32, #tpu.memory_space<vmem>>, vector<1x128xf32>
    %4 = vector.broadcast %3 : vector<1x128xf32> to vector<128x128xf32>
    %5 = arith.mulf %2, %4 : vector<128x128xf32>
    %c0_5 = arith.constant 0 : index
    %c0_6 = arith.constant 0 : index
    %6 = vector.load %arg4[%c0_5, %c0_6] : memref<1x128xf32, #tpu.memory_space<vmem>>, vector<1x128xf32>
    %7 = vector.broadcast %6 : vector<1x128xf32> to vector<128x128xf32>
    %8 = arith.addf %5, %7 : vector<128x128xf32>
    %cst_7 = arith.constant 0.000000e+00 : f32
    %9 = vector.broadcast %cst_7 : f32 to vector<128x128xf32>
    %10 = arith.maximumf %8, %9 : vector<128x128xf32>
    %c0_8 = arith.constant 0 : index
    %c0_9 = arith.constant 0 : index
    %11 = vector.load %arg5[%c0_8, %c0_9] : memref<128x128xf32, #tpu.memory_space<vmem>>, vector<128x128xf32>
    tpu.vector_store %arg5[%c0_8, %c0_9], %10 {strides = array<i32>} : memref<128x128xf32, #tpu.memory_space<vmem>>, vector<128x128xf32>,
    return
  }
  func.func @transform_0(%arg0: i32) -> (i32, i32) {
    %c0_i32 = arith.constant 0 : i32
    %c0_i32_0 = arith.constant 0 : i32
    return %arg0, %c0_i32 : i32, i32
  }
  func.func @transform_1(%arg0: i32) -> (i32, i32) {
    %c0_i32 = arith.constant 0 : i32
    %c0_i32_0 = arith.constant 0 : i32
    %c0_i32_1 = arith.constant 0 : i32
    return %c0_i32, %c0_i32_0 : i32, i32
  }
  func.func @transform_2(%arg0: i32) -> (i32, i32) {
    %c0_i32 = arith.constant 0 : i32
    %c0_i32_0 = arith.constant 0 : i32
    %c0_i32_1 = arith.constant 0 : i32
    return %c0_i32, %c0_i32_0 : i32, i32
  }
  func.func @transform_3(%arg0: i32) -> (i32, i32) {
    %c0_i32 = arith.constant 0 : i32
    %c0_i32_0 = arith.constant 0 : i32
    %c0_i32_1 = arith.constant 0 : i32
    return %c0_i32, %c0_i32_0 : i32, i32
  }
  func.func @transform_4(%arg0: i32) -> (i32, i32) {
    %c0_i32 = arith.constant 0 : i32
    %c0_i32_0 = arith.constant 0 : i32
    return %arg0, %c0_i32 : i32, i32
  }
}

module attributes {stable_mosaic.version = 11 : i64} {
  func.func @_conv_bn_kernel(%arg0: i32, %arg1: memref<128x4xbf16, #tpu.memory_space<vmem>>, %arg2: memref<4x128xbf16, #tpu.memory_space<vmem>>, %arg3: memref<1x128xf32, #tpu.memory_space<vmem>>, %arg4: memref<1x128xf32, #tpu.memory_space<vmem>>, %arg5: memref<128x128xf32, #tpu.memory_space<vmem>>) attributes {dimension_semantics = [#tpu.dimension_semantics<parallel>], iteration_bounds = array<i64: 1>, scalar_prefetch = 0 : i64, scratch_operands = 0 : i64, tpu.core_type = #tpu.core_type<tc>, window_params = [{transform_indices = @transform_0, window_bounds = array<i64: 128, 4>}, {pipeline_mode = #tpu.pipeline_mode<synchronous>, transform_indices = @transform_1, window_bounds = array<i64: 4, 128>}, {pipeline_mode = #tpu.pipeline_mode<synchronous>, transform_indices = @transform_2, window_bounds = array<i64: 1, 128>}, {pipeline_mode = #tpu.pipeline_mode<synchronous>, transform_indices = @transform_3, window_bounds = array<i64: 1, 128>}, {transform_indices = @transform_4, window_bounds = array<i64: 128, 128>}]} {
    %c0 = arith.constant 0 : index
    %c0_0 = arith.constant 0 : index
    %0 = vector.load %arg1[%c0, %c0_0] : memref<128x4xbf16, #tpu.memory_space<vmem>>, vector<128x4xbf16>
    %c0_1 = arith.constant 0 : index
    %c0_2 = arith.constant 0 : index
    %1 = vector.load %arg2[%c0_1, %c0_2] : memref<4x128xbf16, #tpu.memory_space<vmem>>, vector<4x128xbf16>
    %cst = arith.constant dense<0.000000e+00> : vector<128x128xf32>
    %2 = tpu.matmul %0, %1, %cst {dimension_numbers = #tpu.dot_dimension_numbers<[1], [0], [0], [1], [0, 0, 1, 1], [], []>} : vector<128x4xbf16>, vector<4x128xbf16>, vector<128x128xf32> -> vector<128x128xf32>
    %c0_3 = arith.constant 0 : index
    %c0_4 = arith.constant 0 : index
    %3 = vector.load %arg3[%c0_3, %c0_4] : memref<1x128xf32, #tpu.memory_space<vmem>>, vector<1x128xf32>
    %4 = vector.broadcast %3 : vector<1x128xf32> to vector<128x128xf32>
    %5 = arith.mulf %2, %4 : vector<128x128xf32>
    %c0_5 = arith.constant 0 : index
    %c0_6 = arith.constant 0 : index
    %6 = vector.load %arg4[%c0_5, %c0_6] : memref<1x128xf32, #tpu.memory_space<vmem>>, vector<1x128xf32>
    %7 = vector.broadcast %6 : vector<1x128xf32> to vector<128x128xf32>
    %8 = arith.addf %5, %7 : vector<128x128xf32>
    %c0_7 = arith.constant 0 : index
    %c0_8 = arith.constant 0 : index
    %9 = vector.load %arg5[%c0_7, %c0_8] : memref<128x128xf32, #tpu.memory_space<vmem>>, vector<128x128xf32>
    tpu.vector_store %arg5[%c0_7, %c0_8], %8 {strides = array<i32>} : memref<128x128xf32, #tpu.memory_space<vmem>>, vector<128x128xf32>,
    return
  }
  func.func @transform_0(%arg0: i32) -> (i32, i32) {
    %c0_i32 = arith.constant 0 : i32
    %c0_i32_0 = arith.constant 0 : i32
    return %arg0, %c0_i32 : i32, i32
  }
  func.func @transform_1(%arg0: i32) -> (i32, i32) {
    %c0_i32 = arith.constant 0 : i32
    %c0_i32_0 = arith.constant 0 : i32
    %c0_i32_1 = arith.constant 0 : i32
    return %c0_i32, %c0_i32_0 : i32, i32
  }
  func.func @transform_2(%arg0: i32) -> (i32, i32) {
    %c0_i32 = arith.constant 0 : i32
    %c0_i32_0 = arith.constant 0 : i32
    %c0_i32_1 = arith.constant 0 : i32
    return %c0_i32, %c0_i32_0 : i32, i32
  }
  func.func @transform_3(%arg0: i32) -> (i32, i32) {
    %c0_i32 = arith.constant 0 : i32
    %c0_i32_0 = arith.constant 0 : i32
    %c0_i32_1 = arith.constant 0 : i32
    return %c0_i32, %c0_i32_0 : i32, i32
  }
  func.func @transform_4(%arg0: i32) -> (i32, i32) {
    %c0_i32 = arith.constant 0 : i32
    %c0_i32_0 = arith.constant 0 : i32
    return %arg0, %c0_i32 : i32, i32
  }
}

module attributes {stable_mosaic.version = 11 : i64} {
  func.func @_conv_bn_add_relu_kernel(%arg0: i32, %arg1: memref<128x72xbf16, #tpu.memory_space<vmem>>, %arg2: memref<72x128xbf16, #tpu.memory_space<vmem>>, %arg3: memref<1x128xf32, #tpu.memory_space<vmem>>, %arg4: memref<1x128xf32, #tpu.memory_space<vmem>>, %arg5: memref<128x128xf32, #tpu.memory_space<vmem>>, %arg6: memref<128x128xf32, #tpu.memory_space<vmem>>) attributes {dimension_semantics = [#tpu.dimension_semantics<parallel>], iteration_bounds = array<i64: 1>, scalar_prefetch = 0 : i64, scratch_operands = 0 : i64, tpu.core_type = #tpu.core_type<tc>, window_params = [{transform_indices = @transform_0, window_bounds = array<i64: 128, 72>}, {pipeline_mode = #tpu.pipeline_mode<synchronous>, transform_indices = @transform_1, window_bounds = array<i64: 72, 128>}, {pipeline_mode = #tpu.pipeline_mode<synchronous>, transform_indices = @transform_2, window_bounds = array<i64: 1, 128>}, {pipeline_mode = #tpu.pipeline_mode<synchronous>, transform_indices = @transform_3, window_bounds = array<i64: 1, 128>}, {transform_indices = @transform_4, window_bounds = array<i64: 128, 128>}, {transform_indices = @transform_5, window_bounds = array<i64: 128, 128>}]} {
    %c0 = arith.constant 0 : index
    %c0_0 = arith.constant 0 : index
    %0 = vector.load %arg1[%c0, %c0_0] : memref<128x72xbf16, #tpu.memory_space<vmem>>, vector<128x72xbf16>
    %c0_1 = arith.constant 0 : index
    %c0_2 = arith.constant 0 : index
    %1 = vector.load %arg2[%c0_1, %c0_2] : memref<72x128xbf16, #tpu.memory_space<vmem>>, vector<72x128xbf16>
    %cst = arith.constant dense<0.000000e+00> : vector<128x128xf32>
    %2 = tpu.matmul %0, %1, %cst {dimension_numbers = #tpu.dot_dimension_numbers<[1], [0], [0], [1], [0, 0, 1, 1], [], []>} : vector<128x72xbf16>, vector<72x128xbf16>, vector<128x128xf32> -> vector<128x128xf32>
    %c0_3 = arith.constant 0 : index
    %c0_4 = arith.constant 0 : index
    %3 = vector.load %arg3[%c0_3, %c0_4] : memref<1x128xf32, #tpu.memory_space<vmem>>, vector<1x128xf32>
    %4 = vector.broadcast %3 : vector<1x128xf32> to vector<128x128xf32>
    %5 = arith.mulf %2, %4 : vector<128x128xf32>
    %c0_5 = arith.constant 0 : index
    %c0_6 = arith.constant 0 : index
    %6 = vector.load %arg4[%c0_5, %c0_6] : memref<1x128xf32, #tpu.memory_space<vmem>>, vector<1x128xf32>
    %7 = vector.broadcast %6 : vector<1x128xf32> to vector<128x128xf32>
    %8 = arith.addf %5, %7 : vector<128x128xf32>
    %c0_7 = arith.constant 0 : index
    %c0_8 = arith.constant 0 : index
    %9 = vector.load %arg5[%c0_7, %c0_8] : memref<128x128xf32, #tpu.memory_space<vmem>>, vector<128x128xf32>
    %10 = arith.addf %8, %9 : vector<128x128xf32>
    %cst_9 = arith.constant 0.000000e+00 : f32
    %11 = vector.broadcast %cst_9 : f32 to vector<128x128xf32>
    %12 = arith.maximumf %10, %11 : vector<128x128xf32>
    %c0_10 = arith.constant 0 : index
    %c0_11 = arith.constant 0 : index
    %13 = vector.load %arg6[%c0_10, %c0_11] : memref<128x128xf32, #tpu.memory_space<vmem>>, vector<128x128xf32>
    tpu.vector_store %arg6[%c0_10, %c0_11], %12 {strides = array<i32>} : memref<128x128xf32, #tpu.memory_space<vmem>>, vector<128x128xf32>,
    return
  }
  func.func @transform_0(%arg0: i32) -> (i32, i32) {
    %c0_i32 = arith.constant 0 : i32
    %c0_i32_0 = arith.constant 0 : i32
    return %arg0, %c0_i32 : i32, i32
  }
  func.func @transform_1(%arg0: i32) -> (i32, i32) {
    %c0_i32 = arith.constant 0 : i32
    %c0_i32_0 = arith.constant 0 : i32
    %c0_i32_1 = arith.constant 0 : i32
    return %c0_i32, %c0_i32_0 : i32, i32
  }
  func.func @transform_2(%arg0: i32) -> (i32, i32) {
    %c0_i32 = arith.constant 0 : i32
    %c0_i32_0 = arith.constant 0 : i32
    %c0_i32_1 = arith.constant 0 : i32
    return %c0_i32, %c0_i32_0 : i32, i32
  }
  func.func @transform_3(%arg0: i32) -> (i32, i32) {
    %c0_i32 = arith.constant 0 : i32
    %c0_i32_0 = arith.constant 0 : i32
    %c0_i32_1 = arith.constant 0 : i32
    return %c0_i32, %c0_i32_0 : i32, i32
  }
  func.func @transform_4(%arg0: i32) -> (i32, i32) {
    %c0_i32 = arith.constant 0 : i32
    %c0_i32_0 = arith.constant 0 : i32
    return %arg0, %c0_i32 : i32, i32
  }
  func.func @transform_5(%arg0: i32) -> (i32, i32) {
    %c0_i32 = arith.constant 0 : i32
    %c0_i32_0 = arith.constant 0 : i32
    return %arg0, %c0_i32 : i32, i32
  }
}

</mosaic_0001>

<llo_original>
// kernel: basic_block_forward.3
$region0: #{basic_block_forward.3}
  #allocation0 [shape = 'u32[]', space=smem, size = 0x4, offset = 0x4, fixed_abs, tag = 'smem constant byte address 0x4 - core index']
  #allocation1 [shape = 'u32[144,128]{1,0:T(1,128)}', space=vmem, size = 0x12000, scoped, tag = 'internal scratch']
  %s0 = inlined_call_operand.vmem [shape: bf16[128,36], index: 0, kind: input, shape index: {}]
  %s1 = inlined_call_operand.vmem [shape: bf16[36,128], index: 1, kind: input, shape index: {}]
  %s2 = inlined_call_operand.vmem [shape: f32[1,128], index: 2, kind: input, shape index: {}]
  %s3 = inlined_call_operand.vmem [shape: f32[1,128], index: 3, kind: input, shape index: {}]
  %s4 = inlined_call_operand.vmem [shape: f32[128,128], index: 4, kind: output, shape index: {}]
  %s5 = sld [smem:[#allocation0]]
  $region26: #{basic_block_forward.3} parent=0
    _
  %s7 = ssub.s32 1, %s5
  %s8 = scalar_select 0, %s7, %s5
  // Predicated region
  $region2: #{basic_block_forward.3} parent=0 // pred_check
    _
  $region3: #{basic_block_forward.3} parent=0 // pred_check_branch
    %10 = sbr.rel (0) target = $region5
  $region4: #{basic_block_forward.3} parent=0 // pred_region
    _
  $region5: #{basic_block_forward.3} parent=0 // pred_fallthru
    _
  // Predicated region
  $region6: #{basic_block_forward.3} parent=0 // pred_check
    _
  $region7: #{basic_block_forward.3} parent=0 // pred_check_branch
    %12 = sbr.rel (0) target = $region9
  $region8: #{basic_block_forward.3} parent=0 // pred_region
    _
  $region9: #{basic_block_forward.3} parent=0 // pred_fallthru
    _
  // Predicated region
  $region10: #{basic_block_forward.3} parent=0 // pred_check
    _
  $region11: #{basic_block_forward.3} parent=0 // pred_check_branch
    %14 = sbr.rel (0) target = $region13
  $region12: #{basic_block_forward.3} parent=0 // pred_region
    _
  $region13: #{basic_block_forward.3} parent=0 // pred_fallthru
    _
  // Predicated region
  $region14: #{basic_block_forward.3} parent=0 // pred_check
    _
  $region15: #{basic_block_forward.3} parent=0 // pred_check_branch
    %16 = sbr.rel (0) target = $region17
  $region16: #{basic_block_forward.3} parent=0 // pred_region
    _
  $region17: #{basic_block_forward.3} parent=0 // pred_fallthru
    _
  %v18 = vld [vmem:[%s0] sm:$0xf]
  %v19 = vld [vmem:[%s0 + $0x4] sm:$0xf]
  %v20 = vld [vmem:[%s0 + $0x8] sm:$0xf]
  %v21 = vld [vmem:[%s0 + $0xc] sm:$0xf]
  %v22 = vld [vmem:[%s0 + $0x10] sm:$0xf]
  %v23 = vld [vmem:[%s0 + $0x14] sm:$0xf]
  %v24 = vld [vmem:[%s0 + $0x18] sm:$0xf]
  %v25 = vld [vmem:[%s0 + $0x1c] sm:$0xf]
  %v26 = vld [vmem:[%s0 + $0x20] sm:$0xf]
  %v27 = vld [vmem:[%s0 + $0x24] sm:$0xf]
  %v28 = vld [vmem:[%s0 + $0x28] sm:$0xf]
  %v29 = vld [vmem:[%s0 + $0x2c] sm:$0xf]
  %v30 = vld [vmem:[%s0 + $0x30] sm:$0xf]
  %v31 = vld [vmem:[%s0 + $0x34] sm:$0xf]
  %v32 = vld [vmem:[%s0 + $0x38] sm:$0xf]
  %v33 = vld [vmem:[%s0 + $0x3c] sm:$0xf]
  %v34 = vld [vmem:[%s1] sm:$0xf]
  %v35 = vld [vmem:[%s1 + $0x4] sm:$0xf]
  %v36 = vld [vmem:[%s1 + $0x8] sm:$0xf]
  %v37 = vld [vmem:[%s1 + $0xc] sm:$0xf]
  %v38 = vld [vmem:[%s1 + $0x10] sm:$0x3]
  %v55 = vunpack.c.l.b16 %v18
  %v56 = vunpack.c.l.b16 %v19
  %v57 = vunpack.c.l.b16 %v20
  %v58 = vunpack.c.l.b16 %v21
  %v59 = vunpack.c.l.b16 %v22
  %v60 = vunpack.c.l.b16 %v23
  %v61 = vunpack.c.l.b16 %v24
  %v62 = vunpack.c.l.b16 %v25
  %v63 = vunpack.c.l.b16 %v26
  %v64 = vunpack.c.l.b16 %v27
  %v65 = vunpack.c.l.b16 %v28
  %v66 = vunpack.c.l.b16 %v29
  %v67 = vunpack.c.l.b16 %v30
  %v68 = vunpack.c.l.b16 %v31
  %v69 = vunpack.c.l.b16 %v32
  %v70 = vunpack.c.l.b16 %v33
  %v71 = vpack.c.b16 %v56, %v55
  %v72 = vpack.c.b16 %v58, %v57
  %v73 = vpack.c.b16 %v60, %v59
  %v74 = vpack.c.b16 %v62, %v61
  %v75 = vpack.c.b16 %v64, %v63
  %v76 = vpack.c.b16 %v66, %v65
  %v77 = vpack.c.b16 %v68, %v67
  %v78 = vpack.c.b16 %v70, %v69
  %v84 = vunpack.c.l.b16 %v34
  %v85 = vunpack.c.l.b16 %v35
  %v86 = vunpack.c.l.b16 %v36
  %v87 = vunpack.c.l.b16 %v37
  %v88 = vunpack.c.l.b16 %v38
  %v89 = vpack.c.b16 %v85, %v84
  %v90 = vpack.c.b16 %v87, %v86
  %v91 = vpack.c.b16 %v88, %v88
  %vm94 = vcmask 293888
  %v96 = vsel %vm94, %v71, 0
  %v99 = vsel %vm94, %v72, 0
  %v102 = vsel %vm94, %v73, 0
  %v105 = vsel %vm94, %v74, 0
  %v108 = vsel %vm94, %v75, 0
  %v111 = vsel %vm94, %v76, 0
  %v114 = vsel %vm94, %v77, 0
  %v117 = vsel %vm94, %v78, 0
  %vm119 = vcmask 1041408
  %v121 = vsel %vm119, %v91, 0
  %123 = vmatprep.subr.bf16.mxu0 0
  %124 = vmatpush1.bf16.msra.mxu0 %v89
  %125 = vmatprep.subr.bf16.mxu0 0
  %126 = vmatpush1.bf16.msra.mxu0 %v90
  %127 = vmatprep.subr.bf16.mxu0 0
  %128 = vmatpush1.bf16.msra.mxu0 %v121
  %129 = vmatprep.subr.bf16.mxu0 0
  %130 = vmatpush1.bf16.msra.mxu0 0
  %131 = vmatprep.subr.bf16.mxu0 0
  %132 = vmatpush1.bf16.msra.mxu0 0
  %133 = vmatprep.subr.bf16.mxu0 0
  %134 = vmatpush1.bf16.msra.mxu0 0
  %135 = vmatprep.subr.bf16.mxu0 0
  %136 = vmatpush1.bf16.msra.mxu0 0
  %137 = vmatprep.subr.bf16.mxu0 0
  %138 = vmatpush1.bf16.msra.mxu0 0
  %139 = vmatprep.subr.bf16.mxu0 0
  %140 = vmatpush1.bf16.msra.mxu0 0
  %141 = vmatprep.subr.bf16.mxu0 0
  %142 = vmatpush1.bf16.msra.mxu0 0
  %143 = vmatprep.subr.bf16.mxu0 0
  %144 = vmatpush1.bf16.msra.mxu0 0
  %145 = vmatprep.subr.bf16.mxu0 0
  %146 = vmatpush1.bf16.msra.mxu0 0
  %147 = vmatprep.subr.bf16.mxu0 0
  %148 = vmatpush1.bf16.msra.mxu0 0
  %149 = vmatprep.subr.bf16.mxu0 0
  %150 = vmatpush1.bf16.msra.mxu0 0
  %151 = vmatprep.subr.bf16.mxu0 0
  %152 = vmatpush1.bf16.msra.mxu0 0
  %153 = vmatprep.subr.bf16.mxu0 0
  %154 = vmatpush1.bf16.msra.mxu0 0
  %155 = vmatprep.mubr.bf16.mxu0 0
  %156 = vmatmul.mubr.bf16.gmra.mrb[0].mxu0 %v96
  %v157 = vpop.f32.mrb[0].mxu0
  %v158 = vadd.f32 0.0, %v157
  %v159 = vpop.f32.mrb[0].mxu0
  %v160 = vpop.f32.mrb[0].mxu0
  %v161 = vadd.f32 0.0, %v160
  %v162 = vpop.f32.mrb[0].mxu0
  %163 = vmatprep.mubr.bf16.mxu0 0
  %164 = vmatmul.mubr.bf16.gmra.mrb[0].mxu0 %v99
  %v165 = vpop.f32.mrb[0].mxu0
  %v166 = vadd.f32 0.0, %v165
  %v167 = vpop.f32.mrb[0].mxu0
  %v168 = vpop.f32.mrb[0].mxu0
  %v169 = vadd.f32 0.0, %v168
  %v170 = vpop.f32.mrb[0].mxu0
  %171 = vmatprep.mubr.bf16.mxu0 0
  %172 = vmatmul.mubr.bf16.gmra.mrb[0].mxu0 %v102
  %v173 = vpop.f32.mrb[0].mxu0
  %v174 = vadd.f32 0.0, %v173
  %v175 = vpop.f32.mrb[0].mxu0
  %v176 = vpop.f32.mrb[0].mxu0
  %v177 = vadd.f32 0.0, %v176
  %v178 = vpop.f32.mrb[0].mxu0
  %179 = vmatprep.mubr.bf16.mxu0 0
  %180 = vmatmul.mubr.bf16.gmra.mrb[0].mxu0 %v105
  %v181 = vpop.f32.mrb[0].mxu0
  %v182 = vadd.f32 0.0, %v181
  %v183 = vpop.f32.mrb[0].mxu0
  %v184 = vpop.f32.mrb[0].mxu0
  %v185 = vadd.f32 0.0, %v184
  %v186 = vpop.f32.mrb[0].mxu0
  %187 = vmatprep.mubr.bf16.mxu0 0
  %188 = vmatmul.mubr.bf16.gmra.mrb[0].mxu0 %v108
  %v189 = vpop.f32.mrb[0].mxu0
  %v190 = vadd.f32 0.0, %v189
  %v191 = vpop.f32.mrb[0].mxu0
  %v192 = vpop.f32.mrb[0].mxu0
  %v193 = vadd.f32 0.0, %v192
  %v194 = vpop.f32.mrb[0].mxu0
  %195 = vmatprep.mubr.bf16.mxu0 0
  %196 = vmatmul.mubr.bf16.gmra.mrb[0].mxu0 %v111
  %v197 = vpop.f32.mrb[0].mxu0
  %v198 = vadd.f32 0.0, %v197
  %v199 = vpop.f32.mrb[0].mxu0
  %v200 = vpop.f32.mrb[0].mxu0
  %v201 = vadd.f32 0.0, %v200
  %v202 = vpop.f32.mrb[0].mxu0
  %203 = vmatprep.mubr.bf16.mxu0 0
  %204 = vmatmul.mubr.bf16.gmra.mrb[0].mxu0 %v114
  %v205 = vpop.f32.mrb[0].mxu0
  %v206 = vadd.f32 0.0, %v205
  %v207 = vpop.f32.mrb[0].mxu0
  %v208 = vpop.f32.mrb[0].mxu0
  %v209 = vadd.f32 0.0, %v208
  %v210 = vpop.f32.mrb[0].mxu0
  %211 = vmatprep.mubr.bf16.mxu0 0
  %212 = vmatmul.mubr.bf16.gmra.mrb[0].mxu0 %v117
  %v213 = vpop.f32.mrb[0].mxu0
  %v214 = vadd.f32 0.0, %v213
  %v215 = vpop.f32.mrb[0].mxu0
  %v216 = vpop.f32.mrb[0].mxu0
  %v217 = vadd.f32 0.0, %v216
  %v218 = vpop.f32.mrb[0].mxu0
  %219 = vdwg.mxu0
  %v220 = vld [vmem:[%s2] sm:$0x1]
  %v222 = vlaneseq
  %v223 = vshrl.u32 %v222, 7
  %v224 = vsub.s32 0, %v223
  %v225 = vrot.slane %v220, %v224
  %v227 = vmul.f32 %v158, %v225
  %v228 = vmul.f32 %v161, %v225
  %v229 = vmul.f32 %v166, %v225
  %v230 = vmul.f32 %v169, %v225
  %v231 = vmul.f32 %v174, %v225
  %v232 = vmul.f32 %v177, %v225
  %v233 = vmul.f32 %v182, %v225
  %v234 = vmul.f32 %v185, %v225
  %v235 = vmul.f32 %v190, %v225
  %v236 = vmul.f32 %v193, %v225
  %v237 = vmul.f32 %v198, %v225
  %v238 = vmul.f32 %v201, %v225
  %v239 = vmul.f32 %v206, %v225
  %v240 = vmul.f32 %v209, %v225
  %v241 = vmul.f32 %v214, %v225
  %v242 = vmul.f32 %v217, %v225
  %v243 = vld [vmem:[%s3] sm:$0x1]
  %v245 = vlaneseq
  %v246 = vshrl.u32 %v245, 7
  %v247 = vsub.s32 0, %v246
  %v248 = vrot.slane %v243, %v247
  %v250 = vadd.f32 %v227, %v248
  %v251 = vadd.f32 %v228, %v248
  %v252 = vadd.f32 %v229, %v248
  %v253 = vadd.f32 %v230, %v248
  %v254 = vadd.f32 %v231, %v248
  %v255 = vadd.f32 %v232, %v248
  %v256 = vadd.f32 %v233, %v248
  %v257 = vadd.f32 %v234, %v248
  %v258 = vadd.f32 %v235, %v248
  %v259 = vadd.f32 %v236, %v248
  %v260 = vadd.f32 %v237, %v248
  %v261 = vadd.f32 %v238, %v248
  %v262 = vadd.f32 %v239, %v248
  %v263 = vadd.f32 %v240, %v248
  %v264 = vadd.f32 %v241, %v248
  %v265 = vadd.f32 %v242, %v248
  %v266 = vmax.f32 %v250, 0.0
  %v267 = vmax.f32 %v251, 0.0
  %v268 = vmax.f32 %v252, 0.0
  %v269 = vmax.f32 %v253, 0.0
  %v270 = vmax.f32 %v254, 0.0
  %v271 = vmax.f32 %v255, 0.0
  %v272 = vmax.f32 %v256, 0.0
  %v273 = vmax.f32 %v257, 0.0
  %v274 = vmax.f32 %v258, 0.0
  %v275 = vmax.f32 %v259, 0.0
  %v276 = vmax.f32 %v260, 0.0
  %v277 = vmax.f32 %v261, 0.0
  %v278 = vmax.f32 %v262, 0.0
  %v279 = vmax.f32 %v263, 0.0
  %v280 = vmax.f32 %v264, 0.0
  %v281 = vmax.f32 %v265, 0.0
  %282 = vst [vmem:[%s4] sm:$0xff] %v266
  %283 = vst [vmem:[%s4 + $0x8] sm:$0xff] %v267
  %284 = vst [vmem:[%s4 + $0x10] sm:$0xff] %v268
  %285 = vst [vmem:[%s4 + $0x18] sm:$0xff] %v269
  %286 = vst [vmem:[%s4 + $0x20] sm:$0xff] %v270
  %287 = vst [vmem:[%s4 + $0x28] sm:$0xff] %v271
  %288 = vst [vmem:[%s4 + $0x30] sm:$0xff] %v272
  %289 = vst [vmem:[%s4 + $0x38] sm:$0xff] %v273
  %290 = vst [vmem:[%s4 + $0x40] sm:$0xff] %v274
  %291 = vst [vmem:[%s4 + $0x48] sm:$0xff] %v275
  %292 = vst [vmem:[%s4 + $0x50] sm:$0xff] %v276
  %293 = vst [vmem:[%s4 + $0x58] sm:$0xff] %v277
  %294 = vst [vmem:[%s4 + $0x60] sm:$0xff] %v278
  %295 = vst [vmem:[%s4 + $0x68] sm:$0xff] %v279
  %296 = vst [vmem:[%s4 + $0x70] sm:$0xff] %v280
  %297 = vst [vmem:[%s4 + $0x78] sm:$0xff] %v281
  // Predicated region
  $region18: #{basic_block_forward.3} parent=0 // pred_check
    _
  $region19: #{basic_block_forward.3} parent=0 // pred_check_branch
    %299 = sbr.rel (0) target = $region21
  $region20: #{basic_block_forward.3} parent=0 // pred_region
    _
  $region21: #{basic_block_forward.3} parent=0 // pred_fallthru
    _
  // Predicated region
  $region22: #{basic_block_forward.3} parent=0 // pred_check
    _
  $region23: #{basic_block_forward.3} parent=0 // pred_check_branch
    %301 = sbr.rel (0) target = $region25
  $region24: #{basic_block_forward.3} parent=0 // pred_region
    _
  $region25: #{basic_block_forward.3} parent=0 // pred_fallthru
    _

// kernel: basic_block_forward.5
$region0: #{basic_block_forward.5}
  #allocation0 [shape = 'u32[]', space=smem, size = 0x4, offset = 0x4, fixed_abs, tag = 'smem constant byte address 0x4 - core index']
  #allocation1 [shape = 'u32[144,128]{1,0:T(1,128)}', space=vmem, size = 0x12000, scoped, tag = 'internal scratch']
  %s0 = inlined_call_operand.vmem [shape: bf16[128,72], index: 0, kind: input, shape index: {}]
  %s1 = inlined_call_operand.vmem [shape: bf16[72,128], index: 1, kind: input, shape index: {}]
  %s2 = inlined_call_operand.vmem [shape: f32[1,128], index: 2, kind: input, shape index: {}]
  %s3 = inlined_call_operand.vmem [shape: f32[1,128], index: 3, kind: input, shape index: {}]
  %s4 = inlined_call_operand.vmem [shape: f32[128,128], index: 4, kind: input, shape index: {}]
  %s5 = inlined_call_operand.vmem [shape: f32[128,128], index: 5, kind: output, shape index: {}]
  %s6 = sld [smem:[#allocation0]]
  $region30: #{basic_block_forward.5} parent=0
    _
  %s8 = ssub.s32 1, %s6
  %s9 = scalar_select 0, %s8, %s6
  // Predicated region
  $region2: #{basic_block_forward.5} parent=0 // pred_check
    _
  $region3: #{basic_block_forward.5} parent=0 // pred_check_branch
    %11 = sbr.rel (0) target = $region5
  $region4: #{basic_block_forward.5} parent=0 // pred_region
    _
  $region5: #{basic_block_forward.5} parent=0 // pred_fallthru
    _
  // Predicated region
  $region6: #{basic_block_forward.5} parent=0 // pred_check
    _
  $region7: #{basic_block_forward.5} parent=0 // pred_check_branch
    %13 = sbr.rel (0) target = $region9
  $region8: #{basic_block_forward.5} parent=0 // pred_region
    _
  $region9: #{basic_block_forward.5} parent=0 // pred_fallthru
    _
  // Predicated region
  $region10: #{basic_block_forward.5} parent=0 // pred_check
    _
  $region11: #{basic_block_forward.5} parent=0 // pred_check_branch
    %15 = sbr.rel (0) target = $region13
  $region12: #{basic_block_forward.5} parent=0 // pred_region
    _
  $region13: #{basic_block_forward.5} parent=0 // pred_fallthru
    _
  // Predicated region
  $region14: #{basic_block_forward.5} parent=0 // pred_check
    _
  $region15: #{basic_block_forward.5} parent=0 // pred_check_branch
    %17 = sbr.rel (0) target = $region17
  $region16: #{basic_block_forward.5} parent=0 // pred_region
    _
  $region17: #{basic_block_forward.5} parent=0 // pred_fallthru
    _
  // Predicated region
  $region18: #{basic_block_forward.5} parent=0 // pred_check
    _
  $region19: #{basic_block_forward.5} parent=0 // pred_check_branch
    %19 = sbr.rel (0) target = $region21
  $region20: #{basic_block_forward.5} parent=0 // pred_region
    _
  $region21: #{basic_block_forward.5} parent=0 // pred_fallthru
    _
  %v21 = vld [vmem:[%s0] sm:$0xf]
  %v22 = vld [vmem:[%s0 + $0x4] sm:$0xf]
  %v23 = vld [vmem:[%s0 + $0x8] sm:$0xf]
  %v24 = vld [vmem:[%s0 + $0xc] sm:$0xf]
  %v25 = vld [vmem:[%s0 + $0x10] sm:$0xf]
  %v26 = vld [vmem:[%s0 + $0x14] sm:$0xf]
  %v27 = vld [vmem:[%s0 + $0x18] sm:$0xf]
  %v28 = vld [vmem:[%s0 + $0x1c] sm:$0xf]
  %v29 = vld [vmem:[%s0 + $0x20] sm:$0xf]
  %v30 = vld [vmem:[%s0 + $0x24] sm:$0xf]
  %v31 = vld [vmem:[%s0 + $0x28] sm:$0xf]
  %v32 = vld [vmem:[%s0 + $0x2c] sm:$0xf]
  %v33 = vld [vmem:[%s0 + $0x30] sm:$0xf]
  %v34 = vld [vmem:[%s0 + $0x34] sm:$0xf]
  %v35 = vld [vmem:[%s0 + $0x38] sm:$0xf]
  %v36 = vld [vmem:[%s0 + $0x3c] sm:$0xf]
  %v37 = vld [vmem:[%s1] sm:$0xf]
  %v38 = vld [vmem:[%s1 + $0x4] sm:$0xf]
  %v39 = vld [vmem:[%s1 + $0x8] sm:$0xf]
  %v40 = vld [vmem:[%s1 + $0xc] sm:$0xf]
  %v41 = vld [vmem:[%s1 + $0x10] sm:$0xf]
  %v42 = vld [vmem:[%s1 + $0x14] sm:$0xf]
  %v43 = vld [vmem:[%s1 + $0x18] sm:$0xf]
  %v44 = vld [vmem:[%s1 + $0x1c] sm:$0xf]
  %v45 = vld [vmem:[%s1 + $0x20] sm:$0xf]
  %v62 = vunpack.c.l.b16 %v21
  %v63 = vunpack.c.l.b16 %v22
  %v64 = vunpack.c.l.b16 %v23
  %v65 = vunpack.c.l.b16 %v24
  %v66 = vunpack.c.l.b16 %v25
  %v67 = vunpack.c.l.b16 %v26
  %v68 = vunpack.c.l.b16 %v27
  %v69 = vunpack.c.l.b16 %v28
  %v70 = vunpack.c.l.b16 %v29
  %v71 = vunpack.c.l.b16 %v30
  %v72 = vunpack.c.l.b16 %v31
  %v73 = vunpack.c.l.b16 %v32
  %v74 = vunpack.c.l.b16 %v33
  %v75 = vunpack.c.l.b16 %v34
  %v76 = vunpack.c.l.b16 %v35
  %v77 = vunpack.c.l.b16 %v36
  %v78 = vpack.c.b16 %v63, %v62
  %v79 = vpack.c.b16 %v65, %v64
  %v80 = vpack.c.b16 %v67, %v66
  %v81 = vpack.c.b16 %v69, %v68
  %v82 = vpack.c.b16 %v71, %v70
  %v83 = vpack.c.b16 %v73, %v72
  %v84 = vpack.c.b16 %v75, %v74
  %v85 = vpack.c.b16 %v77, %v76
  %v95 = vunpack.c.l.b16 %v37
  %v96 = vunpack.c.l.b16 %v38
  %v97 = vunpack.c.l.b16 %v39
  %v98 = vunpack.c.l.b16 %v40
  %v99 = vunpack.c.l.b16 %v41
  %v100 = vunpack.c.l.b16 %v42
  %v101 = vunpack.c.l.b16 %v43
  %v102 = vunpack.c.l.b16 %v44
  %v103 = vunpack.c.l.b16 %v45
  %v104 = vpack.c.b16 %v96, %v95
  %v105 = vpack.c.b16 %v98, %v97
  %v106 = vpack.c.b16 %v100, %v99
  %v107 = vpack.c.b16 %v102, %v101
  %v108 = vpack.c.b16 %v103, %v103
  %vm113 = vcmask 588800
  %v115 = vsel %vm113, %v78, 0
  %v118 = vsel %vm113, %v79, 0
  %v121 = vsel %vm113, %v80, 0
  %v124 = vsel %vm113, %v81, 0
  %v127 = vsel %vm113, %v82, 0
  %v130 = vsel %vm113, %v83, 0
  %v133 = vsel %vm113, %v84, 0
  %v136 = vsel %vm113, %v85, 0
  %vm138 = vcmask 1043456
  %v140 = vsel %vm138, %v108, 0
  %142 = vmatprep.subr.bf16.mxu0 0
  %143 = vmatpush1.bf16.msra.mxu0 %v104
  %144 = vmatprep.subr.bf16.mxu0 0
  %145 = vmatpush1.bf16.msra.mxu0 %v105
  %146 = vmatprep.subr.bf16.mxu0 0
  %147 = vmatpush1.bf16.msra.mxu0 %v106
  %148 = vmatprep.subr.bf16.mxu0 0
  %149 = vmatpush1.bf16.msra.mxu0 %v107
  %150 = vmatprep.subr.bf16.mxu0 0
  %151 = vmatpush1.bf16.msra.mxu0 %v140
  %152 = vmatprep.subr.bf16.mxu0 0
  %153 = vmatpush1.bf16.msra.mxu0 0
  %154 = vmatprep.subr.bf16.mxu0 0
  %155 = vmatpush1.bf16.msra.mxu0 0
  %156 = vmatprep.subr.bf16.mxu0 0
  %157 = vmatpush1.bf16.msra.mxu0 0
  %158 = vmatprep.subr.bf16.mxu0 0
  %159 = vmatpush1.bf16.msra.mxu0 0
  %160 = vmatprep.subr.bf16.mxu0 0
  %161 = vmatpush1.bf16.msra.mxu0 0
  %162 = vmatprep.subr.bf16.mxu0 0
  %163 = vmatpush1.bf16.msra.mxu0 0
  %164 = vmatprep.subr.bf16.mxu0 0
  %165 = vmatpush1.bf16.msra.mxu0 0
  %166 = vmatprep.subr.bf16.mxu0 0
  %167 = vmatpush1.bf16.msra.mxu0 0
  %168 = vmatprep.subr.bf16.mxu0 0
  %169 = vmatpush1.bf16.msra.mxu0 0
  %170 = vmatprep.subr.bf16.mxu0 0
  %171 = vmatpush1.bf16.msra.mxu0 0
  %172 = vmatprep.subr.bf16.mxu0 0
  %173 = vmatpush1.bf16.msra.mxu0 0
  %174 = vmatprep.mubr.bf16.mxu0 0
  %175 = vmatmul.mubr.bf16.gmra.mrb[0].mxu0 %v115
  %v176 = vpop.f32.mrb[0].mxu0
  %v177 = vadd.f32 0.0, %v176
  %v178 = vpop.f32.mrb[0].mxu0
  %v179 = vpop.f32.mrb[0].mxu0
  %v180 = vadd.f32 0.0, %v179
  %v181 = vpop.f32.mrb[0].mxu0
  %182 = vmatprep.mubr.bf16.mxu0 0
  %183 = vmatmul.mubr.bf16.gmra.mrb[0].mxu0 %v118
  %v184 = vpop.f32.mrb[0].mxu0
  %v185 = vadd.f32 0.0, %v184
  %v186 = vpop.f32.mrb[0].mxu0
  %v187 = vpop.f32.mrb[0].mxu0
  %v188 = vadd.f32 0.0, %v187
  %v189 = vpop.f32.mrb[0].mxu0
  %190 = vmatprep.mubr.bf16.mxu0 0
  %191 = vmatmul.mubr.bf16.gmra.mrb[0].mxu0 %v121
  %v192 = vpop.f32.mrb[0].mxu0
  %v193 = vadd.f32 0.0, %v192
  %v194 = vpop.f32.mrb[0].mxu0
  %v195 = vpop.f32.mrb[0].mxu0
  %v196 = vadd.f32 0.0, %v195
  %v197 = vpop.f32.mrb[0].mxu0
  %198 = vmatprep.mubr.bf16.mxu0 0
  %199 = vmatmul.mubr.bf16.gmra.mrb[0].mxu0 %v124
  %v200 = vpop.f32.mrb[0].mxu0
  %v201 = vadd.f32 0.0, %v200
  %v202 = vpop.f32.mrb[0].mxu0
  %v203 = vpop.f32.mrb[0].mxu0
  %v204 = vadd.f32 0.0, %v203
  %v205 = vpop.f32.mrb[0].mxu0
  %206 = vmatprep.mubr.bf16.mxu0 0
  %207 = vmatmul.mubr.bf16.gmra.mrb[0].mxu0 %v127
  %v208 = vpop.f32.mrb[0].mxu0
  %v209 = vadd.f32 0.0, %v208
  %v210 = vpop.f32.mrb[0].mxu0
  %v211 = vpop.f32.mrb[0].mxu0
  %v212 = vadd.f32 0.0, %v211
  %v213 = vpop.f32.mrb[0].mxu0
  %214 = vmatprep.mubr.bf16.mxu0 0
  %215 = vmatmul.mubr.bf16.gmra.mrb[0].mxu0 %v130
  %v216 = vpop.f32.mrb[0].mxu0
  %v217 = vadd.f32 0.0, %v216
  %v218 = vpop.f32.mrb[0].mxu0
  %v219 = vpop.f32.mrb[0].mxu0
  %v220 = vadd.f32 0.0, %v219
  %v221 = vpop.f32.mrb[0].mxu0
  %222 = vmatprep.mubr.bf16.mxu0 0
  %223 = vmatmul.mubr.bf16.gmra.mrb[0].mxu0 %v133
  %v224 = vpop.f32.mrb[0].mxu0
  %v225 = vadd.f32 0.0, %v224
  %v226 = vpop.f32.mrb[0].mxu0
  %v227 = vpop.f32.mrb[0].mxu0
  %v228 = vadd.f32 0.0, %v227
  %v229 = vpop.f32.mrb[0].mxu0
  %230 = vmatprep.mubr.bf16.mxu0 0
  %231 = vmatmul.mubr.bf16.gmra.mrb[0].mxu0 %v136
  %v232 = vpop.f32.mrb[0].mxu0
  %v233 = vadd.f32 0.0, %v232
  %v234 = vpop.f32.mrb[0].mxu0
  %v235 = vpop.f32.mrb[0].mxu0
  %v236 = vadd.f32 0.0, %v235
  %v237 = vpop.f32.mrb[0].mxu0
  %238 = vdwg.mxu0
  %v239 = vld [vmem:[%s2] sm:$0x1]
  %v241 = vlaneseq
  %v242 = vshrl.u32 %v241, 7
  %v243 = vsub.s32 0, %v242
  %v244 = vrot.slane %v239, %v243
  %v246 = vmul.f32 %v177, %v244
  %v247 = vmul.f32 %v180, %v244
  %v248 = vmul.f32 %v185, %v244
  %v249 = vmul.f32 %v188, %v244
  %v250 = vmul.f32 %v193, %v244
  %v251 = vmul.f32 %v196, %v244
  %v252 = vmul.f32 %v201, %v244
  %v253 = vmul.f32 %v204, %v244
  %v254 = vmul.f32 %v209, %v244
  %v255 = vmul.f32 %v212, %v244
  %v256 = vmul.f32 %v217, %v244
  %v257 = vmul.f32 %v220, %v244
  %v258 = vmul.f32 %v225, %v244
  %v259 = vmul.f32 %v228, %v244
  %v260 = vmul.f32 %v233, %v244
  %v261 = vmul.f32 %v236, %v244
  %v262 = vld [vmem:[%s3] sm:$0x1]
  %v264 = vlaneseq
  %v265 = vshrl.u32 %v264, 7
  %v266 = vsub.s32 0, %v265
  %v267 = vrot.slane %v262, %v266
  %v269 = vadd.f32 %v246, %v267
  %v270 = vadd.f32 %v247, %v267
  %v271 = vadd.f32 %v248, %v267
  %v272 = vadd.f32 %v249, %v267
  %v273 = vadd.f32 %v250, %v267
  %v274 = vadd.f32 %v251, %v267
  %v275 = vadd.f32 %v252, %v267
  %v276 = vadd.f32 %v253, %v267
  %v277 = vadd.f32 %v254, %v267
  %v278 = vadd.f32 %v255, %v267
  %v279 = vadd.f32 %v256, %v267
  %v280 = vadd.f32 %v257, %v267
  %v281 = vadd.f32 %v258, %v267
  %v282 = vadd.f32 %v259, %v267
  %v283 = vadd.f32 %v260, %v267
  %v284 = vadd.f32 %v261, %v267
  %v285 = vld [vmem:[%s4] sm:$0xff]
  %v286 = vld [vmem:[%s4 + $0x8] sm:$0xff]
  %v287 = vld [vmem:[%s4 + $0x10] sm:$0xff]
  %v288 = vld [vmem:[%s4 + $0x18] sm:$0xff]
  %v289 = vld [vmem:[%s4 + $0x20] sm:$0xff]
  %v290 = vld [vmem:[%s4 + $0x28] sm:$0xff]
  %v291 = vld [vmem:[%s4 + $0x30] sm:$0xff]
  %v292 = vld [vmem:[%s4 + $0x38] sm:$0xff]
  %v293 = vld [vmem:[%s4 + $0x40] sm:$0xff]
  %v294 = vld [vmem:[%s4 + $0x48] sm:$0xff]
  %v295 = vld [vmem:[%s4 + $0x50] sm:$0xff]
  %v296 = vld [vmem:[%s4 + $0x58] sm:$0xff]
  %v297 = vld [vmem:[%s4 + $0x60] sm:$0xff]
  %v298 = vld [vmem:[%s4 + $0x68] sm:$0xff]
  %v299 = vld [vmem:[%s4 + $0x70] sm:$0xff]
  %v300 = vld [vmem:[%s4 + $0x78] sm:$0xff]
  %v301 = vadd.f32 %v269, %v285
  %v302 = vadd.f32 %v270, %v286
  %v303 = vadd.f32 %v271, %v287
  %v304 = vadd.f32 %v272, %v288
  %v305 = vadd.f32 %v273, %v289
  %v306 = vadd.f32 %v274, %v290
  %v307 = vadd.f32 %v275, %v291
  %v308 = vadd.f32 %v276, %v292
  %v309 = vadd.f32 %v277, %v293
  %v310 = vadd.f32 %v278, %v294
  %v311 = vadd.f32 %v279, %v295
  %v312 = vadd.f32 %v280, %v296
  %v313 = vadd.f32 %v281, %v297
  %v314 = vadd.f32 %v282, %v298
  %v315 = vadd.f32 %v283, %v299
  %v316 = vadd.f32 %v284, %v300
  %v317 = vmax.f32 %v301, 0.0
  %v318 = vmax.f32 %v302, 0.0
  %v319 = vmax.f32 %v303, 0.0
  %v320 = vmax.f32 %v304, 0.0
  %v321 = vmax.f32 %v305, 0.0
  %v322 = vmax.f32 %v306, 0.0
  %v323 = vmax.f32 %v307, 0.0
  %v324 = vmax.f32 %v308, 0.0
  %v325 = vmax.f32 %v309, 0.0
  %v326 = vmax.f32 %v310, 0.0
  %v327 = vmax.f32 %v311, 0.0
  %v328 = vmax.f32 %v312, 0.0
  %v329 = vmax.f32 %v313, 0.0
  %v330 = vmax.f32 %v314, 0.0
  %v331 = vmax.f32 %v315, 0.0
  %v332 = vmax.f32 %v316, 0.0
  %333 = vst [vmem:[%s5] sm:$0xff] %v317
  %334 = vst [vmem:[%s5 + $0x8] sm:$0xff] %v318
  %335 = vst [vmem:[%s5 + $0x10] sm:$0xff] %v319
  %336 = vst [vmem:[%s5 + $0x18] sm:$0xff] %v320
  %337 = vst [vmem:[%s5 + $0x20] sm:$0xff] %v321
  %338 = vst [vmem:[%s5 + $0x28] sm:$0xff] %v322
  %339 = vst [vmem:[%s5 + $0x30] sm:$0xff] %v323
  %340 = vst [vmem:[%s5 + $0x38] sm:$0xff] %v324
  %341 = vst [vmem:[%s5 + $0x40] sm:$0xff] %v325
  %342 = vst [vmem:[%s5 + $0x48] sm:$0xff] %v326
  %343 = vst [vmem:[%s5 + $0x50] sm:$0xff] %v327
  %344 = vst [vmem:[%s5 + $0x58] sm:$0xff] %v328
  %345 = vst [vmem:[%s5 + $0x60] sm:$0xff] %v329
  %346 = vst [vmem:[%s5 + $0x68] sm:$0xff] %v330
  %347 = vst [vmem:[%s5 + $0x70] sm:$0xff] %v331
  %348 = vst [vmem:[%s5 + $0x78] sm:$0xff] %v332
  // Predicated region
  $region22: #{basic_block_forward.5} parent=0 // pred_check
    _
  $region23: #{basic_block_forward.5} parent=0 // pred_check_branch
    %350 = sbr.rel (0) target = $region25
  $region24: #{basic_block_forward.5} parent=0 // pred_region
    _
  $region25: #{basic_block_forward.5} parent=0 // pred_fallthru
    _
  // Predicated region
  $region26: #{basic_block_forward.5} parent=0 // pred_check
    _
  $region27: #{basic_block_forward.5} parent=0 // pred_check_branch
    %352 = sbr.rel (0) target = $region29
  $region28: #{basic_block_forward.5} parent=0 // pred_region
    _
  $region29: #{basic_block_forward.5} parent=0 // pred_fallthru
    _

// kernel: basic_block_forward.4
$region0: #{basic_block_forward.4}
  #allocation0 [shape = 'u32[]', space=smem, size = 0x4, offset = 0x4, fixed_abs, tag = 'smem constant byte address 0x4 - core index']
  #allocation1 [shape = 'u32[144,128]{1,0:T(1,128)}', space=vmem, size = 0x12000, scoped, tag = 'internal scratch']
  %s0 = inlined_call_operand.vmem [shape: bf16[128,4], index: 0, kind: input, shape index: {}]
  %s1 = inlined_call_operand.vmem [shape: bf16[4,128], index: 1, kind: input, shape index: {}]
  %s2 = inlined_call_operand.vmem [shape: f32[1,128], index: 2, kind: input, shape index: {}]
  %s3 = inlined_call_operand.vmem [shape: f32[1,128], index: 3, kind: input, shape index: {}]
  %s4 = inlined_call_operand.vmem [shape: f32[128,128], index: 4, kind: output, shape index: {}]
  %s5 = sld [smem:[#allocation0]]
  $region26: #{basic_block_forward.4} parent=0
    _
  %s7 = ssub.s32 1, %s5
  %s8 = scalar_select 0, %s7, %s5
  // Predicated region
  $region2: #{basic_block_forward.4} parent=0 // pred_check
    _
  $region3: #{basic_block_forward.4} parent=0 // pred_check_branch
    %10 = sbr.rel (0) target = $region5
  $region4: #{basic_block_forward.4} parent=0 // pred_region
    _
  $region5: #{basic_block_forward.4} parent=0 // pred_fallthru
    _
  // Predicated region
  $region6: #{basic_block_forward.4} parent=0 // pred_check
    _
  $region7: #{basic_block_forward.4} parent=0 // pred_check_branch
    %12 = sbr.rel (0) target = $region9
  $region8: #{basic_block_forward.4} parent=0 // pred_region
    _
  $region9: #{basic_block_forward.4} parent=0 // pred_fallthru
    _
  // Predicated region
  $region10: #{basic_block_forward.4} parent=0 // pred_check
    _
  $region11: #{basic_block_forward.4} parent=0 // pred_check_branch
    %14 = sbr.rel (0) target = $region13
  $region12: #{basic_block_forward.4} parent=0 // pred_region
    _
  $region13: #{basic_block_forward.4} parent=0 // pred_fallthru
    _
  // Predicated region
  $region14: #{basic_block_forward.4} parent=0 // pred_check
    _
  $region15: #{basic_block_forward.4} parent=0 // pred_check_branch
    %16 = sbr.rel (0) target = $region17
  $region16: #{basic_block_forward.4} parent=0 // pred_region
    _
  $region17: #{basic_block_forward.4} parent=0 // pred_fallthru
    _
  %v18 = vld [vmem:[%s0] sm:$0xf]
  %v19 = vld [vmem:[%s0 + $0x4] sm:$0xf]
  %v20 = vld [vmem:[%s0 + $0x8] sm:$0xf]
  %v21 = vld [vmem:[%s0 + $0xc] sm:$0xf]
  %v22 = vld [vmem:[%s0 + $0x10] sm:$0xf]
  %v23 = vld [vmem:[%s0 + $0x14] sm:$0xf]
  %v24 = vld [vmem:[%s0 + $0x18] sm:$0xf]
  %v25 = vld [vmem:[%s0 + $0x1c] sm:$0xf]
  %v26 = vld [vmem:[%s0 + $0x20] sm:$0xf]
  %v27 = vld [vmem:[%s0 + $0x24] sm:$0xf]
  %v28 = vld [vmem:[%s0 + $0x28] sm:$0xf]
  %v29 = vld [vmem:[%s0 + $0x2c] sm:$0xf]
  %v30 = vld [vmem:[%s0 + $0x30] sm:$0xf]
  %v31 = vld [vmem:[%s0 + $0x34] sm:$0xf]
  %v32 = vld [vmem:[%s0 + $0x38] sm:$0xf]
  %v33 = vld [vmem:[%s0 + $0x3c] sm:$0xf]
  %v34 = vld [vmem:[%s1] sm:$0x3]
  %v51 = vunpack.c.l.b16 %v18
  %v52 = vunpack.c.l.b16 %v19
  %v53 = vunpack.c.l.b16 %v20
  %v54 = vunpack.c.l.b16 %v21
  %v55 = vunpack.c.l.b16 %v22
  %v56 = vunpack.c.l.b16 %v23
  %v57 = vunpack.c.l.b16 %v24
  %v58 = vunpack.c.l.b16 %v25
  %v59 = vunpack.c.l.b16 %v26
  %v60 = vunpack.c.l.b16 %v27
  %v61 = vunpack.c.l.b16 %v28
  %v62 = vunpack.c.l.b16 %v29
  %v63 = vunpack.c.l.b16 %v30
  %v64 = vunpack.c.l.b16 %v31
  %v65 = vunpack.c.l.b16 %v32
  %v66 = vunpack.c.l.b16 %v33
  %v67 = vpack.c.b16 %v52, %v51
  %v68 = vpack.c.b16 %v54, %v53
  %v69 = vpack.c.b16 %v56, %v55
  %v70 = vpack.c.b16 %v58, %v57
  %v71 = vpack.c.b16 %v60, %v59
  %v72 = vpack.c.b16 %v62, %v61
  %v73 = vpack.c.b16 %v64, %v63
  %v74 = vpack.c.b16 %v66, %v65
  %vm75 = vcmask 31744
  %v77 = vsel %vm75, %v67, 0
  %v80 = vsel %vm75, %v68, 0
  %v83 = vsel %vm75, %v69, 0
  %v86 = vsel %vm75, %v70, 0
  %v89 = vsel %vm75, %v71, 0
  %v92 = vsel %vm75, %v72, 0
  %v95 = vsel %vm75, %v73, 0
  %v98 = vsel %vm75, %v74, 0
  %vm100 = vcmask 1041408
  %v102 = vsel %vm100, %v34, 0
  %104 = vmatprep.subr.bf16.mxu0 0
  %105 = vmatpush1.bf16.msra.mxu0 %v102
  %106 = vmatprep.subr.bf16.mxu0 0
  %107 = vmatpush1.bf16.msra.mxu0 0
  %108 = vmatprep.subr.bf16.mxu0 0
  %109 = vmatpush1.bf16.msra.mxu0 0
  %110 = vmatprep.subr.bf16.mxu0 0
  %111 = vmatpush1.bf16.msra.mxu0 0
  %112 = vmatprep.subr.bf16.mxu0 0
  %113 = vmatpush1.bf16.msra.mxu0 0
  %114 = vmatprep.subr.bf16.mxu0 0
  %115 = vmatpush1.bf16.msra.mxu0 0
  %116 = vmatprep.subr.bf16.mxu0 0
  %117 = vmatpush1.bf16.msra.mxu0 0
  %118 = vmatprep.subr.bf16.mxu0 0
  %119 = vmatpush1.bf16.msra.mxu0 0
  %120 = vmatprep.subr.bf16.mxu0 0
  %121 = vmatpush1.bf16.msra.mxu0 0
  %122 = vmatprep.subr.bf16.mxu0 0
  %123 = vmatpush1.bf16.msra.mxu0 0
  %124 = vmatprep.subr.bf16.mxu0 0
  %125 = vmatpush1.bf16.msra.mxu0 0
  %126 = vmatprep.subr.bf16.mxu0 0
  %127 = vmatpush1.bf16.msra.mxu0 0
  %128 = vmatprep.subr.bf16.mxu0 0
  %129 = vmatpush1.bf16.msra.mxu0 0
  %130 = vmatprep.subr.bf16.mxu0 0
  %131 = vmatpush1.bf16.msra.mxu0 0
  %132 = vmatprep.subr.bf16.mxu0 0
  %133 = vmatpush1.bf16.msra.mxu0 0
  %134 = vmatprep.subr.bf16.mxu0 0
  %135 = vmatpush1.bf16.msra.mxu0 0
  %136 = vmatprep.mubr.bf16.mxu0 0
  %137 = vmatmul.mubr.bf16.gmra.mrb[0].mxu0 %v77
  %v138 = vpop.f32.mrb[0].mxu0
  %v139 = vadd.f32 0.0, %v138
  %v140 = vpop.f32.mrb[0].mxu0
  %v141 = vpop.f32.mrb[0].mxu0
  %v142 = vadd.f32 0.0, %v141
  %v143 = vpop.f32.mrb[0].mxu0
  %144 = vmatprep.mubr.bf16.mxu0 0
  %145 = vmatmul.mubr.bf16.gmra.mrb[0].mxu0 %v80
  %v146 = vpop.f32.mrb[0].mxu0
  %v147 = vadd.f32 0.0, %v146
  %v148 = vpop.f32.mrb[0].mxu0
  %v149 = vpop.f32.mrb[0].mxu0
  %v150 = vadd.f32 0.0, %v149
  %v151 = vpop.f32.mrb[0].mxu0
  %152 = vmatprep.mubr.bf16.mxu0 0
  %153 = vmatmul.mubr.bf16.gmra.mrb[0].mxu0 %v83
  %v154 = vpop.f32.mrb[0].mxu0
  %v155 = vadd.f32 0.0, %v154
  %v156 = vpop.f32.mrb[0].mxu0
  %v157 = vpop.f32.mrb[0].mxu0
  %v158 = vadd.f32 0.0, %v157
  %v159 = vpop.f32.mrb[0].mxu0
  %160 = vmatprep.mubr.bf16.mxu0 0
  %161 = vmatmul.mubr.bf16.gmra.mrb[0].mxu0 %v86
  %v162 = vpop.f32.mrb[0].mxu0
  %v163 = vadd.f32 0.0, %v162
  %v164 = vpop.f32.mrb[0].mxu0
  %v165 = vpop.f32.mrb[0].mxu0
  %v166 = vadd.f32 0.0, %v165
  %v167 = vpop.f32.mrb[0].mxu0
  %168 = vmatprep.mubr.bf16.mxu0 0
  %169 = vmatmul.mubr.bf16.gmra.mrb[0].mxu0 %v89
  %v170 = vpop.f32.mrb[0].mxu0
  %v171 = vadd.f32 0.0, %v170
  %v172 = vpop.f32.mrb[0].mxu0
  %v173 = vpop.f32.mrb[0].mxu0
  %v174 = vadd.f32 0.0, %v173
  %v175 = vpop.f32.mrb[0].mxu0
  %176 = vmatprep.mubr.bf16.mxu0 0
  %177 = vmatmul.mubr.bf16.gmra.mrb[0].mxu0 %v92
  %v178 = vpop.f32.mrb[0].mxu0
  %v179 = vadd.f32 0.0, %v178
  %v180 = vpop.f32.mrb[0].mxu0
  %v181 = vpop.f32.mrb[0].mxu0
  %v182 = vadd.f32 0.0, %v181
  %v183 = vpop.f32.mrb[0].mxu0
  %184 = vmatprep.mubr.bf16.mxu0 0
  %185 = vmatmul.mubr.bf16.gmra.mrb[0].mxu0 %v95
  %v186 = vpop.f32.mrb[0].mxu0
  %v187 = vadd.f32 0.0, %v186
  %v188 = vpop.f32.mrb[0].mxu0
  %v189 = vpop.f32.mrb[0].mxu0
  %v190 = vadd.f32 0.0, %v189
  %v191 = vpop.f32.mrb[0].mxu0
  %192 = vmatprep.mubr.bf16.mxu0 0
  %193 = vmatmul.mubr.bf16.gmra.mrb[0].mxu0 %v98
  %v194 = vpop.f32.mrb[0].mxu0
  %v195 = vadd.f32 0.0, %v194
  %v196 = vpop.f32.mrb[0].mxu0
  %v197 = vpop.f32.mrb[0].mxu0
  %v198 = vadd.f32 0.0, %v197
  %v199 = vpop.f32.mrb[0].mxu0
  %200 = vdwg.mxu0
  %v201 = vld [vmem:[%s2] sm:$0x1]
  %v203 = vlaneseq
  %v204 = vshrl.u32 %v203, 7
  %v205 = vsub.s32 0, %v204
  %v206 = vrot.slane %v201, %v205
  %v208 = vmul.f32 %v139, %v206
  %v209 = vmul.f32 %v142, %v206
  %v210 = vmul.f32 %v147, %v206
  %v211 = vmul.f32 %v150, %v206
  %v212 = vmul.f32 %v155, %v206
  %v213 = vmul.f32 %v158, %v206
  %v214 = vmul.f32 %v163, %v206
  %v215 = vmul.f32 %v166, %v206
  %v216 = vmul.f32 %v171, %v206
  %v217 = vmul.f32 %v174, %v206
  %v218 = vmul.f32 %v179, %v206
  %v219 = vmul.f32 %v182, %v206
  %v220 = vmul.f32 %v187, %v206
  %v221 = vmul.f32 %v190, %v206
  %v222 = vmul.f32 %v195, %v206
  %v223 = vmul.f32 %v198, %v206
  %v224 = vld [vmem:[%s3] sm:$0x1]
  %v226 = vlaneseq
  %v227 = vshrl.u32 %v226, 7
  %v228 = vsub.s32 0, %v227
  %v229 = vrot.slane %v224, %v228
  %v231 = vadd.f32 %v208, %v229
  %v232 = vadd.f32 %v209, %v229
  %v233 = vadd.f32 %v210, %v229
  %v234 = vadd.f32 %v211, %v229
  %v235 = vadd.f32 %v212, %v229
  %v236 = vadd.f32 %v213, %v229
  %v237 = vadd.f32 %v214, %v229
  %v238 = vadd.f32 %v215, %v229
  %v239 = vadd.f32 %v216, %v229
  %v240 = vadd.f32 %v217, %v229
  %v241 = vadd.f32 %v218, %v229
  %v242 = vadd.f32 %v219, %v229
  %v243 = vadd.f32 %v220, %v229
  %v244 = vadd.f32 %v221, %v229
  %v245 = vadd.f32 %v222, %v229
  %v246 = vadd.f32 %v223, %v229
  %247 = vst [vmem:[%s4] sm:$0xff] %v231
  %248 = vst [vmem:[%s4 + $0x8] sm:$0xff] %v232
  %249 = vst [vmem:[%s4 + $0x10] sm:$0xff] %v233
  %250 = vst [vmem:[%s4 + $0x18] sm:$0xff] %v234
  %251 = vst [vmem:[%s4 + $0x20] sm:$0xff] %v235
  %252 = vst [vmem:[%s4 + $0x28] sm:$0xff] %v236
  %253 = vst [vmem:[%s4 + $0x30] sm:$0xff] %v237
  %254 = vst [vmem:[%s4 + $0x38] sm:$0xff] %v238
  %255 = vst [vmem:[%s4 + $0x40] sm:$0xff] %v239
  %256 = vst [vmem:[%s4 + $0x48] sm:$0xff] %v240
  %257 = vst [vmem:[%s4 + $0x50] sm:$0xff] %v241
  %258 = vst [vmem:[%s4 + $0x58] sm:$0xff] %v242
  %259 = vst [vmem:[%s4 + $0x60] sm:$0xff] %v243
  %260 = vst [vmem:[%s4 + $0x68] sm:$0xff] %v244
  %261 = vst [vmem:[%s4 + $0x70] sm:$0xff] %v245
  %262 = vst [vmem:[%s4 + $0x78] sm:$0xff] %v246
  // Predicated region
  $region18: #{basic_block_forward.4} parent=0 // pred_check
    _
  $region19: #{basic_block_forward.4} parent=0 // pred_check_branch
    %264 = sbr.rel (0) target = $region21
  $region20: #{basic_block_forward.4} parent=0 // pred_region
    _
  $region21: #{basic_block_forward.4} parent=0 // pred_fallthru
    _
  // Predicated region
  $region22: #{basic_block_forward.4} parent=0 // pred_check
    _
  $region23: #{basic_block_forward.4} parent=0 // pred_check_branch
    %266 = sbr.rel (0) target = $region25
  $region24: #{basic_block_forward.4} parent=0 // pred_region
    _
  $region25: #{basic_block_forward.4} parent=0 // pred_fallthru
    _

</llo_original>
